<compile_context>
chip_gen: v7x
topology: tpu7x:2x2x1
jax: 0.10.0
libtpu: 0.0.40
codegen_flags: <defaults>
</compile_context>

<pallas_src>
import jax
import jax.numpy as jnp
from jax import lax
from jax.experimental import pallas as pl
from jax.experimental.pallas import tpu as pltpu


def _round_up(n, m):
    return ((n + m - 1) // m) * m


def dqn_kernel(x_ref, w1_ref, b1_ref, w2_ref, b2_ref, w3t_ref, b3_ref, o_ref):
    # x_ref: (tile_b, n_features) exactly as laid out in HBM (batch on sublanes).
    x = x_ref[...].astype(w1_ref.dtype)
    # Layer 1: contract the feature axis of both operands (q @ k.T pattern) so
    # h1 is lane-dense: (32, n_features) x (tile_b, n_features) -> (32, tile_b).
    # Dropout = identity at inference.
    h1 = lax.dot_general(w1_ref[...], x, (((1,), (1,)), ((), ())),
                         preferred_element_type=jnp.float32)
    h1 = jnp.maximum(h1 + b1_ref[...], 0.0)                   # f32 bias + ReLU
    # Layer 2: (16, 32) @ (32, tile_b) -> (16, tile_b), still lane-dense.
    h2 = jnp.dot(w2_ref[...], h1.astype(w2_ref.dtype),
                 preferred_element_type=jnp.float32)
    h2 = jnp.maximum(h2 + b2_ref[...], 0.0)                   # f32 bias + ReLU
    # Layer 3: aligned (16, tile_b) -> (tile_b, 16) in-kernel transpose, then a
    # plain dot with the pre-transposed w3 so the stored tile is already
    # (tile_b, n_actions) -- no wrapper-side transpose pass over the logits.
    h2t = h2.T.astype(w3t_ref.dtype)                          # (tile_b, 16)
    logits = jnp.dot(h2t, w3t_ref[...],                       # (tile_b, n_actions)
                     preferred_element_type=jnp.float32)
    o_ref[...] = (logits + b3_ref[...]).astype(o_ref.dtype)


def dqn_forward(x, params, *, compute_dtype=jnp.float32, tile_b=32768):
    """Fused 3-layer MLP forward.

    x: (B, n_features) f32 (or bf16).  params: W (out, in), b (out, 1).
    Returns (B, n_actions) f32 logits.
    """
    w1, b1, w2, b2, w3, b3 = params
    B, n_features = x.shape
    n_actions = w3.shape[0]

    # Batch tile (lane axis of the in-kernel intermediates): multiple of 128,
    # clamped so a small batch does not over-allocate.  Tail blocks rely on
    # Pallas' implicit masking (no wrapper-side padding pass over x).
    tile_b = max(128, min(int(tile_b), _round_up(B, 128)))
    tile_b = _round_up(tile_b, 128)
    grid = (pl.cdiv(B, tile_b),)

    # Tiny one-time weight prep (a few hundred bytes): cast + transpose w3.
    w1c = w1.astype(compute_dtype)
    w2c = w2.astype(compute_dtype)
    w3t = w3.T.astype(compute_dtype)          # (16, n_actions)
    b3r = b3.reshape(1, n_actions)            # row bias for (tile_b, n_actions)
    # b1, b2, b3r stay f32 (f32 bias-add / ReLU in-kernel).

    def resident(a):  # full block, same block every grid step -> stays resident
        return pl.BlockSpec(a.shape, lambda i: (0,) * a.ndim)

    flops = 2 * B * (n_features * 32 + 32 * 16 + 16 * n_actions)
    bytes_accessed = (
        x.size * x.dtype.itemsize
        + sum(a.size * a.dtype.itemsize for a in (w1c, b1, w2c, b2, w3t, b3r))
        + B * n_actions * 4)

    # VMEM budget: double-buffered x/out tiles + lane-dense intermediates.
    vmem_bytes = int(
        2 * tile_b * n_features * x.dtype.itemsize
        + 2 * tile_b * n_actions * 4
        + 4 * tile_b * 32 * 4          # h1 (+ cast / ReLU temporaries)
        + 4 * tile_b * 16 * 4          # h2 / h2t temporaries
        + (2 << 20))                   # weights, biases, margin
    vmem_limit = min(max(vmem_bytes, 32 << 20), 64 << 20)

    out = pl.pallas_call(
        dqn_kernel,
        out_shape=jax.ShapeDtypeStruct((B, n_actions), jnp.float32),
        grid=grid,
        in_specs=[
            pl.BlockSpec((tile_b, n_features), lambda i: (i, 0)),
            resident(w1c), resident(b1),
            resident(w2c), resident(b2),
            resident(w3t), resident(b3r),
        ],
        out_specs=pl.BlockSpec((tile_b, n_actions), lambda i: (i, 0)),
        compiler_params=pltpu.CompilerParams(
            dimension_semantics=("parallel",),
            vmem_limit_bytes=vmem_limit),
        cost_estimate=pl.CostEstimate(
            flops=flops, transcendentals=0, bytes_accessed=bytes_accessed),
    )(x, w1c, b1, w2c, b2, w3t, b3r)
    return out


def init_dqn_params(key, n_features, n_actions):
    """Deterministic init matching nn.Linear's U(-1/sqrt(fan_in), 1/sqrt(fan_in)).

    Weights are stored (out_features, in_features); biases (out_features, 1).
    """
    dims = [(n_features, 32), (32, 16), (16, n_actions)]
    params = []
    for (fan_in, fan_out) in dims:
        key, kw, kb = jax.random.split(key, 3)
        bound = 1.0 / jnp.sqrt(jnp.float32(fan_in))
        w = jax.random.uniform(kw, (fan_out, fan_in), jnp.float32, -bound, bound)
        b = jax.random.uniform(kb, (fan_out, 1), jnp.float32, -bound, bound)
        params += [w, b]
    return tuple(params)


def dqn_reference(x, params):
    w1, b1, w2, b2, w3, b3 = params
    h1 = jnp.maximum(x @ w1.T + b1.T, 0.0)
    h2 = jnp.maximum(h1 @ w2.T + b2.T, 0.0)
    return h2 @ w3.T + b3.T


if __name__ == "__main__":
    key = jax.random.PRNGKey(0)
    batch, n_features, n_actions = 2, 8, 4

    key, kx = jax.random.split(key)
    x = jax.random.normal(kx, (batch, n_features), jnp.float32)
    params = init_dqn_params(key, n_features, n_actions)
    ref = dqn_reference(x, params)

    # f32 compute path (strict check).
    out = jax.block_until_ready(dqn_forward(x, params))
    assert out.shape == (batch, n_actions)
    assert jnp.allclose(out, ref, atol=1e-5, rtol=1e-5)

    # bf16 compute path (f32 accumulation; looser tolerance).
    out_bf16 = jax.block_until_ready(
        dqn_forward(x, params, compute_dtype=jnp.bfloat16))
    assert out_bf16.shape == (batch, n_actions)
    assert jnp.allclose(out_bf16, ref, atol=1e-1, rtol=1e-1)

    # Multi-step grid + implicit tail-block masking (B not a tile multiple).
    key, kx2 = jax.random.split(key)
    x_big = jax.random.normal(kx2, (300, n_features), jnp.float32)
    out_big = jax.block_until_ready(dqn_forward(x_big, params, tile_b=128))
    ref_big = dqn_reference(x_big, params)
    assert out_big.shape == (300, n_actions)
    assert jnp.allclose(out_big, ref_big, atol=1e-5, rtol=1e-5)

    print("KERNEL_OK")
</pallas_src>

<mosaic_0001>
module attributes {stable_mosaic.version = 11 : i64} {
  func.func @dqn_kernel(%arg0: i32, %arg1: memref<128x8xf32, #tpu.memory_space<vmem>>, %arg2: memref<32x8xf32, #tpu.memory_space<vmem>>, %arg3: memref<32x1xf32, #tpu.memory_space<vmem>>, %arg4: memref<16x32xf32, #tpu.memory_space<vmem>>, %arg5: memref<16x1xf32, #tpu.memory_space<vmem>>, %arg6: memref<16x4xf32, #tpu.memory_space<vmem>>, %arg7: memref<1x4xf32, #tpu.memory_space<vmem>>, %arg8: memref<128x4xf32, #tpu.memory_space<vmem>>) attributes {dimension_semantics = [#tpu.dimension_semantics<parallel>], iteration_bounds = array<i64: 1>, scalar_prefetch = 0 : i64, scratch_operands = 0 : i64, tpu.core_type = #tpu.core_type<tc>, window_params = [{transform_indices = @transform_0, window_bounds = array<i64: 128, 8>}, {pipeline_mode = #tpu.pipeline_mode<synchronous>, transform_indices = @transform_1, window_bounds = array<i64: 32, 8>}, {pipeline_mode = #tpu.pipeline_mode<synchronous>, transform_indices = @transform_2, window_bounds = array<i64: 32, 1>}, {pipeline_mode = #tpu.pipeline_mode<synchronous>, transform_indices = @transform_3, window_bounds = array<i64: 16, 32>}, {pipeline_mode = #tpu.pipeline_mode<synchronous>, transform_indices = @transform_4, window_bounds = array<i64: 16, 1>}, {pipeline_mode = #tpu.pipeline_mode<synchronous>, transform_indices = @transform_5, window_bounds = array<i64: 16, 4>}, {pipeline_mode = #tpu.pipeline_mode<synchronous>, transform_indices = @transform_6, window_bounds = array<i64: 1, 4>}, {transform_indices = @transform_7, window_bounds = array<i64: 128, 4>}]} {
    %c0 = arith.constant 0 : index
    %c0_0 = arith.constant 0 : index
    %0 = vector.load %arg1[%c0, %c0_0] : memref<128x8xf32, #tpu.memory_space<vmem>>, vector<128x8xf32>
    %c0_1 = arith.constant 0 : index
    %c0_2 = arith.constant 0 : index
    %1 = vector.load %arg2[%c0_1, %c0_2] : memref<32x8xf32, #tpu.memory_space<vmem>>, vector<32x8xf32>
    %cst = arith.constant dense<0.000000e+00> : vector<32x128xf32>
    %2 = tpu.matmul %1, %0, %cst {dimension_numbers = #tpu.dot_dimension_numbers<[1], [1], [0], [0], [0, 0, 1, 0], [], []>} : vector<32x8xf32>, vector<128x8xf32>, vector<32x128xf32> -> vector<32x128xf32>
    %c0_3 = arith.constant 0 : index
    %c0_4 = arith.constant 0 : index
    %3 = vector.load %arg3[%c0_3, %c0_4] : memref<32x1xf32, #tpu.memory_space<vmem>>, vector<32x1xf32>
    %4 = vector.broadcast %3 : vector<32x1xf32> to vector<32x128xf32>
    %5 = arith.addf %2, %4 : vector<32x128xf32>
    %cst_5 = arith.constant 0.000000e+00 : f32
    %6 = vector.broadcast %cst_5 : f32 to vector<32x128xf32>
    %7 = arith.maximumf %5, %6 : vector<32x128xf32>
    %c0_6 = arith.constant 0 : index
    %c0_7 = arith.constant 0 : index
    %8 = vector.load %arg4[%c0_6, %c0_7] : memref<16x32xf32, #tpu.memory_space<vmem>>, vector<16x32xf32>
    %cst_8 = arith.constant dense<0.000000e+00> : vector<16x128xf32>
    %9 = tpu.matmul %8, %7, %cst_8 {dimension_numbers = #tpu.dot_dimension_numbers<[1], [0], [0], [1], [0, 0, 1, 1], [], []>} : vector<16x32xf32>, vector<32x128xf32>, vector<16x128xf32> -> vector<16x128xf32>
    %c0_9 = arith.constant 0 : index
    %c0_10 = arith.constant 0 : index
    %10 = vector.load %arg5[%c0_9, %c0_10] : memref<16x1xf32, #tpu.memory_space<vmem>>, vector<16x1xf32>
    %11 = vector.broadcast %10 : vector<16x1xf32> to vector<16x128xf32>
    %12 = arith.addf %9, %11 : vector<16x128xf32>
    %cst_11 = arith.constant 0.000000e+00 : f32
    %13 = vector.broadcast %cst_11 : f32 to vector<16x128xf32>
    %14 = arith.maximumf %12, %13 : vector<16x128xf32>
    %15 = tpu.transpose %14, [1, 0] : vector<16x128xf32> -> vector<128x16xf32>
    %c0_12 = arith.constant 0 : index
    %c0_13 = arith.constant 0 : index
    %16 = vector.load %arg6[%c0_12, %c0_13] : memref<16x4xf32, #tpu.memory_space<vmem>>, vector<16x4xf32>
    %cst_14 = arith.constant dense<0.000000e+00> : vector<128x4xf32>
    %17 = tpu.matmul %15, %16, %cst_14 {dimension_numbers = #tpu.dot_dimension_numbers<[1], [0], [0], [1], [0, 0, 1, 1], [], []>} : vector<128x16xf32>, vector<16x4xf32>, vector<128x4xf32> -> vector<128x4xf32>
    %c0_15 = arith.constant 0 : index
    %c0_16 = arith.constant 0 : index
    %18 = vector.load %arg7[%c0_15, %c0_16] : memref<1x4xf32, #tpu.memory_space<vmem>>, vector<1x4xf32>
    %19 = vector.broadcast %18 : vector<1x4xf32> to vector<128x4xf32>
    %20 = arith.addf %17, %19 : vector<128x4xf32>
    %c0_17 = arith.constant 0 : index
    %c0_18 = arith.constant 0 : index
    %21 = vector.load %arg8[%c0_17, %c0_18] : memref<128x4xf32, #tpu.memory_space<vmem>>, vector<128x4xf32>
    tpu.vector_store %arg8[%c0_17, %c0_18], %20 {strides = array<i32>} : memref<128x4xf32, #tpu.memory_space<vmem>>, vector<128x4xf32>,
    return
  }
  func.func @transform_0(%arg0: i32) -> (i32, i32) {
    %c0_i32 = arith.constant 0 : i32
    %c0_i32_0 = arith.constant 0 : i32
    return %arg0, %c0_i32 : i32, i32
  }
  func.func @transform_1(%arg0: i32) -> (i32, i32) {
    %c0_i32 = arith.constant 0 : i32
    %c0_i32_0 = arith.constant 0 : i32
    %c0_i32_1 = arith.constant 0 : i32
    return %c0_i32, %c0_i32_0 : i32, i32
  }
  func.func @transform_2(%arg0: i32) -> (i32, i32) {
    %c0_i32 = arith.constant 0 : i32
    %c0_i32_0 = arith.constant 0 : i32
    %c0_i32_1 = arith.constant 0 : i32
    return %c0_i32, %c0_i32_0 : i32, i32
  }
  func.func @transform_3(%arg0: i32) -> (i32, i32) {
    %c0_i32 = arith.constant 0 : i32
    %c0_i32_0 = arith.constant 0 : i32
    %c0_i32_1 = arith.constant 0 : i32
    return %c0_i32, %c0_i32_0 : i32, i32
  }
  func.func @transform_4(%arg0: i32) -> (i32, i32) {
    %c0_i32 = arith.constant 0 : i32
    %c0_i32_0 = arith.constant 0 : i32
    %c0_i32_1 = arith.constant 0 : i32
    return %c0_i32, %c0_i32_0 : i32, i32
  }
  func.func @transform_5(%arg0: i32) -> (i32, i32) {
    %c0_i32 = arith.constant 0 : i32
    %c0_i32_0 = arith.constant 0 : i32
    %c0_i32_1 = arith.constant 0 : i32
    return %c0_i32, %c0_i32_0 : i32, i32
  }
  func.func @transform_6(%arg0: i32) -> (i32, i32) {
    %c0_i32 = arith.constant 0 : i32
    %c0_i32_0 = arith.constant 0 : i32
    %c0_i32_1 = arith.constant 0 : i32
    return %c0_i32, %c0_i32_0 : i32, i32
  }
  func.func @transform_7(%arg0: i32) -> (i32, i32) {
    %c0_i32 = arith.constant 0 : i32
    %c0_i32_0 = arith.constant 0 : i32
    return %arg0, %c0_i32 : i32, i32
  }
}

</mosaic_0001>

<llo_original>
// kernel: tpu_custom_call.1
$region0: #{tpu_custom_call.1}
  #allocation0 [shape = 'u32[]', space=smem, size = 0x4, offset = 0x4, fixed_abs, tag = 'smem constant byte address 0x4 - core index']
  #allocation1 [shape = 'u32[144,128]{1,0:T(1,128)}', space=vmem, size = 0x12000, scoped, tag = 'internal scratch']
  %s0 = inlined_call_operand.vmem [shape: f32[2,8], index: 0, kind: input, shape index: {}]
  %s1 = inlined_call_operand.vmem [shape: f32[32,8], index: 1, kind: input, shape index: {}]
  %s2 = inlined_call_operand.vmem [shape: f32[32,1], index: 2, kind: input, shape index: {}]
  %s3 = inlined_call_operand.vmem [shape: f32[16,32], index: 3, kind: input, shape index: {}]
  %s4 = inlined_call_operand.vmem [shape: f32[16,1], index: 4, kind: input, shape index: {}]
  %s5 = inlined_call_operand.vmem [shape: f32[16,4], index: 5, kind: input, shape index: {}]
  %s6 = inlined_call_operand.vmem [shape: f32[1,4], index: 6, kind: input, shape index: {}]
  %s7 = inlined_call_operand.hbm [shape: f32[2,4], index: 7, kind: output, shape index: {}]
  %s8 = sld [smem:[#allocation0]]
  $region38: #{tpu_custom_call.1} parent=0
    _
  %s10 = ssub.s32 1, %s8
  %s11 = scalar_select 0, %s10, %s8
  $region1: #{tpu_custom_call.1} parent=0
    #allocation2 [shape = 'u8[65536]{0}', space=vmem, size = 0x10000, scoped, tag = 'output window, operand 0, single buffered']
    #allocation3 [shape = 's32[1]{0}', space=sflag, size = 0x4, scoped, tag = 'scoped memory for tpu_custom_call.1']
    %12 = vsyncpa [#allocation3], 0
    // Predicated region
    $region2: #{tpu_custom_call.1} parent=1 // pred_check
      _
    $region3: #{tpu_custom_call.1} parent=1 // pred_check_branch
      %14 = sbr.rel (0) target = $region5
    $region4: #{tpu_custom_call.1} parent=1 // pred_region
      _
    $region5: #{tpu_custom_call.1} parent=1 // pred_fallthru
      _
    // Predicated region
    $region6: #{tpu_custom_call.1} parent=1 // pred_check
      _
    $region7: #{tpu_custom_call.1} parent=1 // pred_check_branch
      %16 = sbr.rel (0) target = $region9
    $region8: #{tpu_custom_call.1} parent=1 // pred_region
      _
    $region9: #{tpu_custom_call.1} parent=1 // pred_fallthru
      _
    // Predicated region
    $region10: #{tpu_custom_call.1} parent=1 // pred_check
      _
    $region11: #{tpu_custom_call.1} parent=1 // pred_check_branch
      %18 = sbr.rel (0) target = $region13
    $region12: #{tpu_custom_call.1} parent=1 // pred_region
      _
    $region13: #{tpu_custom_call.1} parent=1 // pred_fallthru
      _
    // Predicated region
    $region14: #{tpu_custom_call.1} parent=1 // pred_check
      _
    $region15: #{tpu_custom_call.1} parent=1 // pred_check_branch
      %20 = sbr.rel (0) target = $region17
    $region16: #{tpu_custom_call.1} parent=1 // pred_region
      _
    $region17: #{tpu_custom_call.1} parent=1 // pred_fallthru
      _
    // Predicated region
    $region18: #{tpu_custom_call.1} parent=1 // pred_check
      _
    $region19: #{tpu_custom_call.1} parent=1 // pred_check_branch
      %22 = sbr.rel (0) target = $region21
    $region20: #{tpu_custom_call.1} parent=1 // pred_region
      _
    $region21: #{tpu_custom_call.1} parent=1 // pred_fallthru
      _
    // Predicated region
    $region22: #{tpu_custom_call.1} parent=1 // pred_check
      _
    $region23: #{tpu_custom_call.1} parent=1 // pred_check_branch
      %24 = sbr.rel (0) target = $region25
    $region24: #{tpu_custom_call.1} parent=1 // pred_region
      _
    $region25: #{tpu_custom_call.1} parent=1 // pred_fallthru
      _
    // Predicated region
    $region26: #{tpu_custom_call.1} parent=1 // pred_check
      _
    $region27: #{tpu_custom_call.1} parent=1 // pred_check_branch
      %26 = sbr.rel (0) target = $region29
    $region28: #{tpu_custom_call.1} parent=1 // pred_region
      _
    $region29: #{tpu_custom_call.1} parent=1 // pred_fallthru
      _
    %v27 = vld [vmem:[%s0] sm:$0xff]
    %v28 = vld [vmem:[%s0 + $0x8] sm:$0xff]
    %v29 = vld [vmem:[%s0 + $0x10] sm:$0xff]
    %v30 = vld [vmem:[%s0 + $0x18] sm:$0xff]
    %v31 = vld [vmem:[%s0 + $0x20] sm:$0xff]
    %v32 = vld [vmem:[%s0 + $0x28] sm:$0xff]
    %v33 = vld [vmem:[%s0 + $0x30] sm:$0xff]
    %v34 = vld [vmem:[%s0 + $0x38] sm:$0xff]
    %v35 = vld [vmem:[%s0 + $0x40] sm:$0xff]
    %v36 = vld [vmem:[%s0 + $0x48] sm:$0xff]
    %v37 = vld [vmem:[%s0 + $0x50] sm:$0xff]
    %v38 = vld [vmem:[%s0 + $0x58] sm:$0xff]
    %v39 = vld [vmem:[%s0 + $0x60] sm:$0xff]
    %v40 = vld [vmem:[%s0 + $0x68] sm:$0xff]
    %v41 = vld [vmem:[%s0 + $0x70] sm:$0xff]
    %v42 = vld [vmem:[%s0 + $0x78] sm:$0xff]
    %v43 = vld [vmem:[%s1] sm:$0xff]
    %v44 = vld [vmem:[%s1 + $0x8] sm:$0xff]
    %v45 = vld [vmem:[%s1 + $0x10] sm:$0xff]
    %v46 = vld [vmem:[%s1 + $0x18] sm:$0xff]
    %v47 = vld [vmem:[%s2] sm:$0xff]
    %v48 = vld [vmem:[%s2 + $0x8] sm:$0xff]
    %v49 = vld [vmem:[%s2 + $0x10] sm:$0xff]
    %v50 = vld [vmem:[%s2 + $0x18] sm:$0xff]
    %52 = vset.pattern.permute.xlu0 0
    %53 = vperm.xlu0 %52, %v47
    %v54 = vpop.permute.xlu0 %53
    %57 = vset.pattern.permute.xlu0 0
    %58 = vperm.xlu0 %57, %v48
    %v59 = vpop.permute.xlu0 %58
    %62 = vset.pattern.permute.xlu0 0
    %63 = vperm.xlu0 %62, %v49
    %v64 = vpop.permute.xlu0 %63
    %67 = vset.pattern.permute.xlu0 0
    %68 = vperm.xlu0 %67, %v50
    %v69 = vpop.permute.xlu0 %68
    %vm71 = vcmask 64512
    %v73 = vsel %vm71, %v43, 0
    %v76 = vsel %vm71, %v44, 0
    %v79 = vsel %vm71, %v45, 0
    %v82 = vsel %vm71, %v46, 0
    %v85 = vsel %vm71, %v27, 0
    %v88 = vsel %vm71, %v28, 0
    %v91 = vsel %vm71, %v29, 0
    %v94 = vsel %vm71, %v30, 0
    %v97 = vsel %vm71, %v31, 0
    %v100 = vsel %vm71, %v32, 0
    %v103 = vsel %vm71, %v33, 0
    %v106 = vsel %vm71, %v34, 0
    %v109 = vsel %vm71, %v35, 0
    %v112 = vsel %vm71, %v36, 0
    %v115 = vsel %vm71, %v37, 0
    %v118 = vsel %vm71, %v38, 0
    %v121 = vsel %vm71, %v39, 0
    %v124 = vsel %vm71, %v40, 0
    %v127 = vsel %vm71, %v41, 0
    %v130 = vsel %vm71, %v42, 0
    %132 = vmatprep.subr.mxu0 0.0
    %133 = vmatpush1.xpose.msra.mxu0 %v85
    %134 = vmatprep.subr.mxu0 0.0
    %135 = vmatpush1.xpose.msra.mxu0 %v88
    %136 = vmatprep.subr.mxu0 0.0
    %137 = vmatpush1.xpose.msra.mxu0 %v91
    %138 = vmatprep.subr.mxu0 0.0
    %139 = vmatpush1.xpose.msra.mxu0 %v94
    %140 = vmatprep.subr.mxu0 0.0
    %141 = vmatpush1.xpose.msra.mxu0 %v97
    %142 = vmatprep.subr.mxu0 0.0
    %143 = vmatpush1.xpose.msra.mxu0 %v100
    %144 = vmatprep.subr.mxu0 0.0
    %145 = vmatpush1.xpose.msra.mxu0 %v103
    %146 = vmatprep.subr.mxu0 0.0
    %147 = vmatpush1.xpose.msra.mxu0 %v106
    %148 = vmatprep.subr.mxu0 0.0
    %149 = vmatpush1.xpose.msra.mxu0 %v109
    %150 = vmatprep.subr.mxu0 0.0
    %151 = vmatpush1.xpose.msra.mxu0 %v112
    %152 = vmatprep.subr.mxu0 0.0
    %153 = vmatpush1.xpose.msra.mxu0 %v115
    %154 = vmatprep.subr.mxu0 0.0
    %155 = vmatpush1.xpose.msra.mxu0 %v118
    %156 = vmatprep.subr.mxu0 0.0
    %157 = vmatpush1.xpose.msra.mxu0 %v121
    %158 = vmatprep.subr.mxu0 0.0
    %159 = vmatpush1.xpose.msra.mxu0 %v124
    %160 = vmatprep.subr.mxu0 0.0
    %161 = vmatpush1.xpose.msra.mxu0 %v127
    %162 = vmatprep.subr.mxu0 0.0
    %163 = vmatpush1.xpose.msra.mxu0 %v130
    %164 = vmatprep.subr.mxu0 0.0
    %165 = vmatpush1.xpose.msra.mxu0 0.0
    %166 = vmatprep.subr.mxu0 0.0
    %167 = vmatpush1.xpose.msra.mxu0 0.0
    %168 = vmatprep.subr.mxu0 0.0
    %169 = vmatpush1.xpose.msra.mxu0 0.0
    %170 = vmatprep.subr.mxu0 0.0
    %171 = vmatpush1.xpose.msra.mxu0 0.0
    %172 = vmatprep.subr.mxu0 0.0
    %173 = vmatpush1.xpose.msra.mxu0 0.0
    %174 = vmatprep.subr.mxu0 0.0
    %175 = vmatpush1.xpose.msra.mxu0 0.0
    %176 = vmatprep.subr.mxu0 0.0
    %177 = vmatpush1.xpose.msra.mxu0 0.0
    %178 = vmatprep.subr.mxu0 0.0
    %179 = vmatpush1.xpose.msra.mxu0 0.0
    %180 = vmatprep.subr.mxu0 0.0
    %181 = vmatpush1.xpose.msra.mxu0 0.0
    %182 = vmatprep.subr.mxu0 0.0
    %183 = vmatpush1.xpose.msra.mxu0 0.0
    %184 = vmatprep.subr.mxu0 0.0
    %185 = vmatpush1.xpose.msra.mxu0 0.0
    %186 = vmatprep.subr.mxu0 0.0
    %187 = vmatpush1.xpose.msra.mxu0 0.0
    %188 = vmatprep.subr.mxu0 0.0
    %189 = vmatpush1.xpose.msra.mxu0 0.0
    %190 = vmatprep.subr.mxu0 0.0
    %191 = vmatpush1.xpose.msra.mxu0 0.0
    %192 = vmatprep.subr.mxu0 0.0
    %193 = vmatpush1.xpose.msra.mxu0 0.0
    %194 = vmatprep.subr.mxu0 0.0
    %195 = vmatpush1.xpose.msra.mxu0 0.0
    %196 = vmatprep.mubr.f32.mxu0 0.0
    %197 = vmatmul.mubr.f32.gmra.mrb[0].mxu0 %v73
    %v198 = vpop.f32.mrb[0].mxu0
    %v199 = vadd.f32 %v54, %v198
    %v200 = vpop.f32.mrb[0].mxu0
    %201 = vmatprep.mubr.f32.mxu0 0.0
    %202 = vmatmul.mubr.f32.gmra.mrb[0].mxu0 %v76
    %v203 = vpop.f32.mrb[0].mxu0
    %v204 = vadd.f32 %v59, %v203
    %v205 = vpop.f32.mrb[0].mxu0
    %206 = vmatprep.mubr.f32.mxu0 0.0
    %207 = vmatmul.mubr.f32.gmra.mrb[0].mxu0 %v79
    %v208 = vpop.f32.mrb[0].mxu0
    %v209 = vadd.f32 %v64, %v208
    %v210 = vpop.f32.mrb[0].mxu0
    %211 = vmatprep.mubr.f32.mxu0 0.0
    %212 = vmatmul.mubr.f32.gmra.mrb[0].mxu0 %v82
    %v213 = vpop.f32.mrb[0].mxu0
    %v214 = vadd.f32 %v69, %v213
    %v215 = vpop.f32.mrb[0].mxu0
    %216 = vdwg.mxu0
    %v217 = vmax.f32 %v199, 0.0
    %v218 = vmax.f32 %v204, 0.0
    %v219 = vmax.f32 %v209, 0.0
    %v220 = vmax.f32 %v214, 0.0
    %v221 = vld [vmem:[%s3] sm:$0xff]
    %v222 = vld [vmem:[%s3 + $0x8] sm:$0xff]
    %v223 = vld [vmem:[%s4] sm:$0xff]
    %v224 = vld [vmem:[%s4 + $0x8] sm:$0xff]
    %226 = vset.pattern.permute.xlu0 0
    %227 = vperm.xlu0 %226, %v223
    %v228 = vpop.permute.xlu0 %227
    %231 = vset.pattern.permute.xlu0 0
    %232 = vperm.xlu0 %231, %v224
    %v233 = vpop.permute.xlu0 %232
    %vm235 = vcmask 261120
    %v237 = vsel %vm235, %v221, 0
    %v240 = vsel %vm235, %v222, 0
    %242 = vmatprep.subr.mxu0 0.0
    %243 = vmatpush1.msra.mxu0 %v217
    %244 = vmatprep.subr.mxu0 0.0
    %245 = vmatpush1.msra.mxu0 %v218
    %246 = vmatprep.subr.mxu0 0.0
    %247 = vmatpush1.msra.mxu0 %v219
    %248 = vmatprep.subr.mxu0 0.0
    %249 = vmatpush1.msra.mxu0 %v220
    %250 = vmatprep.subr.mxu0 0.0
    %251 = vmatpush1.msra.mxu0 0.0
    %252 = vmatprep.subr.mxu0 0.0
    %253 = vmatpush1.msra.mxu0 0.0
    %254 = vmatprep.subr.mxu0 0.0
    %255 = vmatpush1.msra.mxu0 0.0
    %256 = vmatprep.subr.mxu0 0.0
    %257 = vmatpush1.msra.mxu0 0.0
    %258 = vmatprep.subr.mxu0 0.0
    %259 = vmatpush1.msra.mxu0 0.0
    %260 = vmatprep.subr.mxu0 0.0
    %261 = vmatpush1.msra.mxu0 0.0
    %262 = vmatprep.subr.mxu0 0.0
    %263 = vmatpush1.msra.mxu0 0.0
    %264 = vmatprep.subr.mxu0 0.0
    %265 = vmatpush1.msra.mxu0 0.0
    %266 = vmatprep.subr.mxu0 0.0
    %267 = vmatpush1.msra.mxu0 0.0
    %268 = vmatprep.subr.mxu0 0.0
    %269 = vmatpush1.msra.mxu0 0.0
    %270 = vmatprep.subr.mxu0 0.0
    %271 = vmatpush1.msra.mxu0 0.0
    %272 = vmatprep.subr.mxu0 0.0
    %273 = vmatpush1.msra.mxu0 0.0
    %274 = vmatprep.subr.mxu0 0.0
    %275 = vmatpush1.msra.mxu0 0.0
    %276 = vmatprep.subr.mxu0 0.0
    %277 = vmatpush1.msra.mxu0 0.0
    %278 = vmatprep.subr.mxu0 0.0
    %279 = vmatpush1.msra.mxu0 0.0
    %280 = vmatprep.subr.mxu0 0.0
    %281 = vmatpush1.msra.mxu0 0.0
    %282 = vmatprep.subr.mxu0 0.0
    %283 = vmatpush1.msra.mxu0 0.0
    %284 = vmatprep.subr.mxu0 0.0
    %285 = vmatpush1.msra.mxu0 0.0
    %286 = vmatprep.subr.mxu0 0.0
    %287 = vmatpush1.msra.mxu0 0.0
    %288 = vmatprep.subr.mxu0 0.0
    %289 = vmatpush1.msra.mxu0 0.0
    %290 = vmatprep.subr.mxu0 0.0
    %291 = vmatpush1.msra.mxu0 0.0
    %292 = vmatprep.subr.mxu0 0.0
    %293 = vmatpush1.msra.mxu0 0.0
    %294 = vmatprep.subr.mxu0 0.0
    %295 = vmatpush1.msra.mxu0 0.0
    %296 = vmatprep.subr.mxu0 0.0
    %297 = vmatpush1.msra.mxu0 0.0
    %298 = vmatprep.subr.mxu0 0.0
    %299 = vmatpush1.msra.mxu0 0.0
    %300 = vmatprep.subr.mxu0 0.0
    %301 = vmatpush1.msra.mxu0 0.0
    %302 = vmatprep.subr.mxu0 0.0
    %303 = vmatpush1.msra.mxu0 0.0
    %304 = vmatprep.subr.mxu0 0.0
    %305 = vmatpush1.msra.mxu0 0.0
    %306 = vmatprep.mubr.f32.mxu0 0.0
    %307 = vmatmul.mubr.f32.gmra.mrb[0].mxu0 %v237
    %v308 = vpop.f32.mrb[0].mxu0
    %v309 = vadd.f32 %v228, %v308
    %v310 = vpop.f32.mrb[0].mxu0
    %311 = vmatprep.mubr.f32.mxu0 0.0
    %312 = vmatmul.mubr.f32.gmra.mrb[0].mxu0 %v240
    %v313 = vpop.f32.mrb[0].mxu0
    %v314 = vadd.f32 %v233, %v313
    %v315 = vpop.f32.mrb[0].mxu0
    %316 = vdwg.mxu0
    %v317 = vmax.f32 %v309, 0.0
    %v318 = vmax.f32 %v314, 0.0
    %319 = vxpose.xlu0.b32.start [1/16] %v317, 128
    %320 = vxpose.xlu0.b32.cont [2/16] %v318, 128
    %321 = vxpose.xlu0.b32.cont [3/16] 0.0, 128
    %322 = vxpose.xlu0.b32.cont [4/16] 0.0, 128
    %323 = vxpose.xlu0.b32.cont [5/16] 0.0, 128
    %324 = vxpose.xlu0.b32.cont [6/16] 0.0, 128
    %325 = vxpose.xlu0.b32.cont [7/16] 0.0, 128
    %326 = vxpose.xlu0.b32.cont [8/16] 0.0, 128
    %327 = vxpose.xlu0.b32.cont [9/16] 0.0, 128
    %328 = vxpose.xlu0.b32.cont [10/16] 0.0, 128
    %329 = vxpose.xlu0.b32.cont [11/16] 0.0, 128
    %330 = vxpose.xlu0.b32.cont [12/16] 0.0, 128
    %331 = vxpose.xlu0.b32.cont [13/16] 0.0, 128
    %332 = vxpose.xlu0.b32.cont [14/16] 0.0, 128
    %333 = vxpose.xlu0.b32.cont [15/16] 0.0, 128
    %334 = vxpose.xlu0.b32.end [16/16] 0.0, 128
    %v335 = vpop.trf.xlu0
    %v336 = vpop.trf.xlu0
    %v337 = vpop.trf.xlu0
    %v338 = vpop.trf.xlu0
    %v339 = vpop.trf.xlu0
    %v340 = vpop.trf.xlu0
    %v341 = vpop.trf.xlu0
    %v342 = vpop.trf.xlu0
    %v343 = vpop.trf.xlu0
    %v344 = vpop.trf.xlu0
    %v345 = vpop.trf.xlu0
    %v346 = vpop.trf.xlu0
    %v347 = vpop.trf.xlu0
    %v348 = vpop.trf.xlu0
    %v349 = vpop.trf.xlu0
    %v350 = vpop.trf.xlu0
    %v351 = vld [vmem:[%s5] sm:$0xff]
    %v352 = vld [vmem:[%s5 + $0x8] sm:$0xff]
    %v353 = vld [vmem:[%s6] sm:$0x1]
    %v355 = vlaneseq
    %v356 = vshrl.u32 %v355, 7
    %v357 = vsub.s32 0, %v356
    %v358 = vrot.slane %v353, %v357
    %vm360 = vcmask 130048
    %v362 = vsel %vm360, %v335, 0
    %v365 = vsel %vm360, %v336, 0
    %v368 = vsel %vm360, %v337, 0
    %v371 = vsel %vm360, %v338, 0
    %v374 = vsel %vm360, %v339, 0
    %v377 = vsel %vm360, %v340, 0
    %v380 = vsel %vm360, %v341, 0
    %v383 = vsel %vm360, %v342, 0
    %v386 = vsel %vm360, %v343, 0
    %v389 = vsel %vm360, %v344, 0
    %v392 = vsel %vm360, %v345, 0
    %v395 = vsel %vm360, %v346, 0
    %v398 = vsel %vm360, %v347, 0
    %v401 = vsel %vm360, %v348, 0
    %v404 = vsel %vm360, %v349, 0
    %v407 = vsel %vm360, %v350, 0
    %409 = vmatprep.subr.mxu0 0.0
    %410 = vmatpush1.msra.mxu0 %v351
    %411 = vmatprep.subr.mxu0 0.0
    %412 = vmatpush1.msra.mxu0 %v352
    %413 = vmatprep.subr.mxu0 0.0
    %414 = vmatpush1.msra.mxu0 0.0
    %415 = vmatprep.subr.mxu0 0.0
    %416 = vmatpush1.msra.mxu0 0.0
    %417 = vmatprep.subr.mxu0 0.0
    %418 = vmatpush1.msra.mxu0 0.0
    %419 = vmatprep.subr.mxu0 0.0
    %420 = vmatpush1.msra.mxu0 0.0
    %421 = vmatprep.subr.mxu0 0.0
    %422 = vmatpush1.msra.mxu0 0.0
    %423 = vmatprep.subr.mxu0 0.0
    %424 = vmatpush1.msra.mxu0 0.0
    %425 = vmatprep.subr.mxu0 0.0
    %426 = vmatpush1.msra.mxu0 0.0
    %427 = vmatprep.subr.mxu0 0.0
    %428 = vmatpush1.msra.mxu0 0.0
    %429 = vmatprep.subr.mxu0 0.0
    %430 = vmatpush1.msra.mxu0 0.0
    %431 = vmatprep.subr.mxu0 0.0
    %432 = vmatpush1.msra.mxu0 0.0
    %433 = vmatprep.subr.mxu0 0.0
    %434 = vmatpush1.msra.mxu0 0.0
    %435 = vmatprep.subr.mxu0 0.0
    %436 = vmatpush1.msra.mxu0 0.0
    %437 = vmatprep.subr.mxu0 0.0
    %438 = vmatpush1.msra.mxu0 0.0
    %439 = vmatprep.subr.mxu0 0.0
    %440 = vmatpush1.msra.mxu0 0.0
    %441 = vmatprep.subr.mxu0 0.0
    %442 = vmatpush1.msra.mxu0 0.0
    %443 = vmatprep.subr.mxu0 0.0
    %444 = vmatpush1.msra.mxu0 0.0
    %445 = vmatprep.subr.mxu0 0.0
    %446 = vmatpush1.msra.mxu0 0.0
    %447 = vmatprep.subr.mxu0 0.0
    %448 = vmatpush1.msra.mxu0 0.0
    %449 = vmatprep.subr.mxu0 0.0
    %450 = vmatpush1.msra.mxu0 0.0
    %451 = vmatprep.subr.mxu0 0.0
    %452 = vmatpush1.msra.mxu0 0.0
    %453 = vmatprep.subr.mxu0 0.0
    %454 = vmatpush1.msra.mxu0 0.0
    %455 = vmatprep.subr.mxu0 0.0
    %456 = vmatpush1.msra.mxu0 0.0
    %457 = vmatprep.subr.mxu0 0.0
    %458 = vmatpush1.msra.mxu0 0.0
    %459 = vmatprep.subr.mxu0 0.0
    %460 = vmatpush1.msra.mxu0 0.0
    %461 = vmatprep.subr.mxu0 0.0
    %462 = vmatpush1.msra.mxu0 0.0
    %463 = vmatprep.subr.mxu0 0.0
    %464 = vmatpush1.msra.mxu0 0.0
    %465 = vmatprep.subr.mxu0 0.0
    %466 = vmatpush1.msra.mxu0 0.0
    %467 = vmatprep.subr.mxu0 0.0
    %468 = vmatpush1.msra.mxu0 0.0
    %469 = vmatprep.subr.mxu0 0.0
    %470 = vmatpush1.msra.mxu0 0.0
    %471 = vmatprep.subr.mxu0 0.0
    %472 = vmatpush1.msra.mxu0 0.0
    %473 = vmatprep.mubr.f32.mxu0 0.0
    %474 = vmatmul.mubr.f32.gmra.mrb[0].mxu0 %v362
    %v475 = vpop.f32.mrb[0].mxu0
    %v476 = vadd.f32 %v358, %v475
    %v477 = vpop.f32.mrb[0].mxu0
    %478 = vmatprep.mubr.f32.mxu0 0.0
    %479 = vmatmul.mubr.f32.gmra.mrb[0].mxu0 %v365
    %v480 = vpop.f32.mrb[0].mxu0
    %v481 = vadd.f32 %v358, %v480
    %v482 = vpop.f32.mrb[0].mxu0
    %483 = vmatprep.mubr.f32.mxu0 0.0
    %484 = vmatmul.mubr.f32.gmra.mrb[0].mxu0 %v368
    %v485 = vpop.f32.mrb[0].mxu0
    %v486 = vadd.f32 %v358, %v485
    %v487 = vpop.f32.mrb[0].mxu0
    %488 = vmatprep.mubr.f32.mxu0 0.0
    %489 = vmatmul.mubr.f32.gmra.mrb[0].mxu0 %v371
    %v490 = vpop.f32.mrb[0].mxu0
    %v491 = vadd.f32 %v358, %v490
    %v492 = vpop.f32.mrb[0].mxu0
    %493 = vmatprep.mubr.f32.mxu0 0.0
    %494 = vmatmul.mubr.f32.gmra.mrb[0].mxu0 %v374
    %v495 = vpop.f32.mrb[0].mxu0
    %v496 = vadd.f32 %v358, %v495
    %v497 = vpop.f32.mrb[0].mxu0
    %498 = vmatprep.mubr.f32.mxu0 0.0
    %499 = vmatmul.mubr.f32.gmra.mrb[0].mxu0 %v377
    %v500 = vpop.f32.mrb[0].mxu0
    %v501 = vadd.f32 %v358, %v500
    %v502 = vpop.f32.mrb[0].mxu0
    %503 = vmatprep.mubr.f32.mxu0 0.0
    %504 = vmatmul.mubr.f32.gmra.mrb[0].mxu0 %v380
    %v505 = vpop.f32.mrb[0].mxu0
    %v506 = vadd.f32 %v358, %v505
    %v507 = vpop.f32.mrb[0].mxu0
    %508 = vmatprep.mubr.f32.mxu0 0.0
    %509 = vmatmul.mubr.f32.gmra.mrb[0].mxu0 %v383
    %v510 = vpop.f32.mrb[0].mxu0
    %v511 = vadd.f32 %v358, %v510
    %v512 = vpop.f32.mrb[0].mxu0
    %513 = vmatprep.mubr.f32.mxu0 0.0
    %514 = vmatmul.mubr.f32.gmra.mrb[0].mxu0 %v386
    %v515 = vpop.f32.mrb[0].mxu0
    %v516 = vadd.f32 %v358, %v515
    %v517 = vpop.f32.mrb[0].mxu0
    %518 = vmatprep.mubr.f32.mxu0 0.0
    %519 = vmatmul.mubr.f32.gmra.mrb[0].mxu0 %v389
    %v520 = vpop.f32.mrb[0].mxu0
    %v521 = vadd.f32 %v358, %v520
    %v522 = vpop.f32.mrb[0].mxu0
    %523 = vmatprep.mubr.f32.mxu0 0.0
    %524 = vmatmul.mubr.f32.gmra.mrb[0].mxu0 %v392
    %v525 = vpop.f32.mrb[0].mxu0
    %v526 = vadd.f32 %v358, %v525
    %v527 = vpop.f32.mrb[0].mxu0
    %528 = vmatprep.mubr.f32.mxu0 0.0
    %529 = vmatmul.mubr.f32.gmra.mrb[0].mxu0 %v395
    %v530 = vpop.f32.mrb[0].mxu0
    %v531 = vadd.f32 %v358, %v530
    %v532 = vpop.f32.mrb[0].mxu0
    %533 = vmatprep.mubr.f32.mxu0 0.0
    %534 = vmatmul.mubr.f32.gmra.mrb[0].mxu0 %v398
    %v535 = vpop.f32.mrb[0].mxu0
    %v536 = vadd.f32 %v358, %v535
    %v537 = vpop.f32.mrb[0].mxu0
    %538 = vmatprep.mubr.f32.mxu0 0.0
    %539 = vmatmul.mubr.f32.gmra.mrb[0].mxu0 %v401
    %v540 = vpop.f32.mrb[0].mxu0
    %v541 = vadd.f32 %v358, %v540
    %v542 = vpop.f32.mrb[0].mxu0
    %543 = vmatprep.mubr.f32.mxu0 0.0
    %544 = vmatmul.mubr.f32.gmra.mrb[0].mxu0 %v404
    %v545 = vpop.f32.mrb[0].mxu0
    %v546 = vadd.f32 %v358, %v545
    %v547 = vpop.f32.mrb[0].mxu0
    %548 = vmatprep.mubr.f32.mxu0 0.0
    %549 = vmatmul.mubr.f32.gmra.mrb[0].mxu0 %v407
    %v550 = vpop.f32.mrb[0].mxu0
    %v551 = vadd.f32 %v358, %v550
    %v552 = vpop.f32.mrb[0].mxu0
    %553 = vdwg.mxu0
    %vm554 = vcmask 31744
    %555 = vst.msk [vmem:[#allocation2] sm:$0xff] %vm554, %v476
    %556 = vst.msk [vmem:[#allocation2 + $0x8] sm:$0xff] %vm554, %v481
    %557 = vst.msk [vmem:[#allocation2 + $0x10] sm:$0xff] %vm554, %v486
    %558 = vst.msk [vmem:[#allocation2 + $0x18] sm:$0xff] %vm554, %v491
    %559 = vst.msk [vmem:[#allocation2 + $0x20] sm:$0xff] %vm554, %v496
    %560 = vst.msk [vmem:[#allocation2 + $0x28] sm:$0xff] %vm554, %v501
    %561 = vst.msk [vmem:[#allocation2 + $0x30] sm:$0xff] %vm554, %v506
    %562 = vst.msk [vmem:[#allocation2 + $0x38] sm:$0xff] %vm554, %v511
    %563 = vst.msk [vmem:[#allocation2 + $0x40] sm:$0xff] %vm554, %v516
    %564 = vst.msk [vmem:[#allocation2 + $0x48] sm:$0xff] %vm554, %v521
    %565 = vst.msk [vmem:[#allocation2 + $0x50] sm:$0xff] %vm554, %v526
    %566 = vst.msk [vmem:[#allocation2 + $0x58] sm:$0xff] %vm554, %v531
    %567 = vst.msk [vmem:[#allocation2 + $0x60] sm:$0xff] %vm554, %v536
    %568 = vst.msk [vmem:[#allocation2 + $0x68] sm:$0xff] %vm554, %v541
    %569 = vst.msk [vmem:[#allocation2 + $0x70] sm:$0xff] %vm554, %v546
    %570 = vst.msk [vmem:[#allocation2 + $0x78] sm:$0xff] %vm554, %v551
    // Predicated region
    $region30: #{tpu_custom_call.1} parent=1 // pred_check
      _
    $region31: #{tpu_custom_call.1} parent=1 // pred_check_branch
      %572 = sbr.rel (0) target = $region33
    $region32: #{tpu_custom_call.1} parent=1 // pred_region
      %s574 = ssub.s32 2048, 32
      %575 = vsyncadd [#allocation3], %s574
      %s576 = sshll.u32 [#allocation2], 4
      %s577 = int_to_ptr.vmem [resolvable:$true] %s576
      %582 = dma.vmem_to_hbm [thread:$0]  %s577, 32, %s7, [#allocation3], 32, 32, 2
    $region33: #{tpu_custom_call.1} parent=1 // pred_fallthru
      _
    // Predicated region
    $region34: #{tpu_custom_call.1} parent=1 // pred_check
      _
    $region35: #{tpu_custom_call.1} parent=1 // pred_check_branch
      %584 = sbr.rel (0) target = $region37
    $region36: #{tpu_custom_call.1} parent=1 // pred_region
      %585 = dma.done [#allocation3], 2048
    $region37: #{tpu_custom_call.1} parent=1 // pred_fallthru
      _
    %586 = vsyncpa [#allocation3], 1

</llo_original>
